<compile_context>
chip_gen: v6e
topology: v6e:2x2x1
jax: 0.10.0
libtpu: 0.0.40
codegen_flags: <defaults>
</compile_context>

<pallas_src>
import functools

import jax
import jax.numpy as jnp
from jax.experimental import pallas as pl
from jax.experimental.pallas import tpu as pltpu


def _round_up(x: int, m: int) -> int:
    return ((x + m - 1) // m) * m


def _typerec_kernel(x_ref, w1_ref, b1_ref, w2_ref, b2_ref,
                    soft_ref, logsoft_ref):
    # x tile: [tn, G] float32.
    x = x_ref[...]

    # hidden_1: Linear(G, hidden)
    h = jnp.dot(x, w1_ref[...], preferred_element_type=jnp.float32) + b1_ref[...]

    # F.leaky_relu (default negative_slope = 0.01).
    h = jnp.where(h > 0, h, 0.01 * h)

    # hidden_2: Linear(hidden, C + 1)
    z = jnp.dot(h, w2_ref[...], preferred_element_type=jnp.float32) + b2_ref[...]

    # Numerically-stable softmax / log_softmax along the class axis.
    m = jnp.max(z, axis=-1, keepdims=True)
    shifted = z - m
    e = jnp.exp(shifted)
    s = jnp.sum(e, axis=-1, keepdims=True)
    inv_s = pl.reciprocal(s, approx=False)

    soft_ref[...] = (e * inv_s).astype(soft_ref.dtype)
    logsoft_ref[...] = (shifted - jnp.log(s)).astype(logsoft_ref.dtype)


def type_recognition_net(x, w1, b1, w2, b2, *, block_rows: int = 512):
    """Full MLP + (softmax, log_softmax) in one gridded Pallas call.

    x:  [N, G] float32
    w1: [G, H] float32      (torch hidden_1.weight transposed)
    b1: [1, H] float32
    w2: [H, C+1] float32    (torch hidden_2.weight transposed)
    b2: [1, C+1] float32
    returns (softmax [N, C+1], log_softmax [N, C+1]) in float32.
    """
    x = x.astype(jnp.float32)
    w1 = w1.astype(jnp.float32)
    b1 = b1.reshape(1, -1).astype(jnp.float32)
    w2 = w2.astype(jnp.float32)
    b2 = b2.reshape(1, -1).astype(jnp.float32)

    N, G = x.shape
    H = w1.shape[1]
    O = w2.shape[1]                       # C + 1

    # Row tile: sublane-aligned (multiple of 8); Pallas handles a partial
    # final block when tn does not divide N (rows are independent).
    tn = min(block_rows, _round_up(N, 8))
    grid = (pl.cdiv(N, tn),)

    x_spec = pl.BlockSpec((tn, G), lambda i: (i, 0))
    w1_spec = pl.BlockSpec((G, H), lambda i: (0, 0))
    b1_spec = pl.BlockSpec((1, H), lambda i: (0, 0))
    w2_spec = pl.BlockSpec((H, O), lambda i: (0, 0))
    b2_spec = pl.BlockSpec((1, O), lambda i: (0, 0))
    out_spec = pl.BlockSpec((tn, O), lambda i: (i, 0))

    cost = pl.CostEstimate(
        flops=2 * N * (G * H + H * O),
        transcendentals=N * (O + 1),
        bytes_accessed=4 * (N * G + 2 * N * O + G * H + H + H * O + O),
    )

    soft, logsoft = pl.pallas_call(
        _typerec_kernel,
        out_shape=(
            jax.ShapeDtypeStruct((N, O), jnp.float32),
            jax.ShapeDtypeStruct((N, O), jnp.float32),
        ),
        grid_spec=pltpu.PrefetchScalarGridSpec(
            num_scalar_prefetch=0,
            grid=grid,
            in_specs=[x_spec, w1_spec, b1_spec, w2_spec, b2_spec],
            out_specs=(out_spec, out_spec),
        ),
        compiler_params=pltpu.CompilerParams(
            dimension_semantics=("parallel",),
        ),
        cost_estimate=cost,
    )(x, w1, b1, w2, b2)

    return soft, logsoft


def _reference(x, w1, b1, w2, b2):
    h = x @ w1 + b1
    h = jnp.where(h > 0, h, 0.01 * h)
    z = h @ w2 + b2
    return jax.nn.softmax(z, axis=1), jax.nn.log_softmax(z, axis=1)


def _check(N, G, C, H, block_rows):
    key = jax.random.PRNGKey(0)
    kx, kw1, kb1, kw2, kb2 = jax.random.split(key, 5)

    x = jax.random.normal(kx, (N, G), dtype=jnp.float32)
    # torch Linear stores (out, in); we store the transposed (in, out) layout.
    w1 = jax.random.normal(kw1, (G, H), dtype=jnp.float32) * 0.1
    b1 = jax.random.normal(kb1, (1, H), dtype=jnp.float32) * 0.1
    w2 = jax.random.normal(kw2, (H, C + 1), dtype=jnp.float32) * 0.1
    b2 = jax.random.normal(kb2, (1, C + 1), dtype=jnp.float32) * 0.1

    soft, logsoft = type_recognition_net(x, w1, b1, w2, b2,
                                         block_rows=block_rows)
    jax.block_until_ready(soft)
    jax.block_until_ready(logsoft)

    soft_ref, logsoft_ref = _reference(x, w1, b1, w2, b2)

    assert soft.shape == (N, C + 1) and logsoft.shape == (N, C + 1)
    assert jnp.allclose(soft, soft_ref, atol=2e-3), "softmax mismatch"
    assert jnp.allclose(logsoft, logsoft_ref, atol=2e-3), "log_softmax mismatch"
    # Internal consistency: rows sum to 1, exp(log_softmax) == softmax.
    assert jnp.allclose(jnp.sum(soft, axis=1), 1.0, atol=1e-5), "row-sum"
    assert jnp.allclose(jnp.exp(logsoft), soft, atol=1e-5), "exp(logsoft)"


if __name__ == "__main__":
    # Small shapes consistent with the module: C classes, G features, hidden.
    _check(N=8, G=16, C=4, H=20, block_rows=512)       # single block
    _check(N=300, G=16, C=4, H=20, block_rows=128)     # multi-block + ragged N
    print("KERNEL_OK")
</pallas_src>

<mosaic_0001>
module attributes {stable_mosaic.version = 11 : i64} {
  func.func @_typerec_kernel(%arg0: i32, %arg1: memref<8x16xf32, #tpu.memory_space<vmem>>, %arg2: memref<16x20xf32, #tpu.memory_space<vmem>>, %arg3: memref<1x20xf32, #tpu.memory_space<vmem>>, %arg4: memref<20x5xf32, #tpu.memory_space<vmem>>, %arg5: memref<1x5xf32, #tpu.memory_space<vmem>>, %arg6: memref<8x5xf32, #tpu.memory_space<vmem>>, %arg7: memref<8x5xf32, #tpu.memory_space<vmem>>) attributes {dimension_semantics = [#tpu.dimension_semantics<parallel>], iteration_bounds = array<i64: 1>, scalar_prefetch = 0 : i64, scratch_operands = 0 : i64, tpu.core_type = #tpu.core_type<tc>, window_params = [{transform_indices = @transform_0, window_bounds = array<i64: 8, 16>}, {pipeline_mode = #tpu.pipeline_mode<synchronous>, transform_indices = @transform_1, window_bounds = array<i64: 16, 20>}, {pipeline_mode = #tpu.pipeline_mode<synchronous>, transform_indices = @transform_2, window_bounds = array<i64: 1, 20>}, {pipeline_mode = #tpu.pipeline_mode<synchronous>, transform_indices = @transform_3, window_bounds = array<i64: 20, 5>}, {pipeline_mode = #tpu.pipeline_mode<synchronous>, transform_indices = @transform_4, window_bounds = array<i64: 1, 5>}, {transform_indices = @transform_5, window_bounds = array<i64: 8, 5>}, {transform_indices = @transform_6, window_bounds = array<i64: 8, 5>}]} {
    %c0 = arith.constant 0 : index
    %c0_0 = arith.constant 0 : index
    %0 = vector.load %arg1[%c0, %c0_0] : memref<8x16xf32, #tpu.memory_space<vmem>>, vector<8x16xf32>
    %c0_1 = arith.constant 0 : index
    %c0_2 = arith.constant 0 : index
    %1 = vector.load %arg2[%c0_1, %c0_2] : memref<16x20xf32, #tpu.memory_space<vmem>>, vector<16x20xf32>
    %cst = arith.constant dense<0.000000e+00> : vector<8x20xf32>
    %2 = tpu.matmul %0, %1, %cst {dimension_numbers = #tpu.dot_dimension_numbers<[1], [0], [0], [1], [0, 0, 1, 1], [], []>} : vector<8x16xf32>, vector<16x20xf32>, vector<8x20xf32> -> vector<8x20xf32>
    %c0_3 = arith.constant 0 : index
    %c0_4 = arith.constant 0 : index
    %3 = vector.load %arg3[%c0_3, %c0_4] : memref<1x20xf32, #tpu.memory_space<vmem>>, vector<1x20xf32>
    %4 = vector.broadcast %3 : vector<1x20xf32> to vector<8x20xf32>
    %5 = arith.addf %2, %4 : vector<8x20xf32>
    %cst_5 = arith.constant 0.000000e+00 : f32
    %6 = vector.broadcast %cst_5 : f32 to vector<8x20xf32>
    %7 = arith.cmpf ogt, %5, %6 : vector<8x20xf32>
    %cst_6 = arith.constant 0.00999999977 : f32
    %8 = vector.broadcast %cst_6 : f32 to vector<8x20xf32>
    %9 = arith.mulf %8, %5 : vector<8x20xf32>
    %10 = arith.select %7, %5, %9 : vector<8x20xi1>, vector<8x20xf32>
    %c0_7 = arith.constant 0 : index
    %c0_8 = arith.constant 0 : index
    %11 = vector.load %arg4[%c0_7, %c0_8] : memref<20x5xf32, #tpu.memory_space<vmem>>, vector<20x5xf32>
    %cst_9 = arith.constant dense<0.000000e+00> : vector<8x5xf32>
    %12 = tpu.matmul %10, %11, %cst_9 {dimension_numbers = #tpu.dot_dimension_numbers<[1], [0], [0], [1], [0, 0, 1, 1], [], []>} : vector<8x20xf32>, vector<20x5xf32>, vector<8x5xf32> -> vector<8x5xf32>
    %c0_10 = arith.constant 0 : index
    %c0_11 = arith.constant 0 : index
    %13 = vector.load %arg5[%c0_10, %c0_11] : memref<1x5xf32, #tpu.memory_space<vmem>>, vector<1x5xf32>
    %14 = vector.broadcast %13 : vector<1x5xf32> to vector<8x5xf32>
    %15 = arith.addf %12, %14 : vector<8x5xf32>
    %cst_12 = arith.constant dense<0xFF800000> : vector<8xf32>
    %16 = vector.multi_reduction <maximumf>, %15, %cst_12 [1] : vector<8x5xf32> to vector<8xf32>
    %17 = vector.shape_cast %16 : vector<8xf32> to vector<8x1xf32>
    %18 = vector.broadcast %17 : vector<8x1xf32> to vector<8x5xf32>
    %19 = arith.subf %15, %18 : vector<8x5xf32>
    %20 = math.exp %19 : vector<8x5xf32>
    %cst_13 = arith.constant dense<0.000000e+00> : vector<8xf32>
    %21 = vector.multi_reduction <add>, %20, %cst_13 [1] : vector<8x5xf32> to vector<8xf32>
    %22 = vector.shape_cast %21 : vector<8xf32> to vector<8x1xf32>
    %23 = tpu.reciprocal %22 : vector<8x1xf32> -> vector<8x1xf32>
    %24 = vector.broadcast %23 : vector<8x1xf32> to vector<8x5xf32>
    %25 = arith.mulf %20, %24 : vector<8x5xf32>
    %c0_14 = arith.constant 0 : index
    %c0_15 = arith.constant 0 : index
    %26 = vector.load %arg6[%c0_14, %c0_15] : memref<8x5xf32, #tpu.memory_space<vmem>>, vector<8x5xf32>
    tpu.vector_store %arg6[%c0_14, %c0_15], %25 {strides = array<i32>} : memref<8x5xf32, #tpu.memory_space<vmem>>, vector<8x5xf32>,
    %27 = math.log %22 : vector<8x1xf32>
    %28 = vector.broadcast %27 : vector<8x1xf32> to vector<8x5xf32>
    %29 = arith.subf %19, %28 : vector<8x5xf32>
    %c0_16 = arith.constant 0 : index
    %c0_17 = arith.constant 0 : index
    %30 = vector.load %arg7[%c0_16, %c0_17] : memref<8x5xf32, #tpu.memory_space<vmem>>, vector<8x5xf32>
    tpu.vector_store %arg7[%c0_16, %c0_17], %29 {strides = array<i32>} : memref<8x5xf32, #tpu.memory_space<vmem>>, vector<8x5xf32>,
    return
  }
  func.func @transform_0(%arg0: i32) -> (i32, i32) {
    %c0_i32 = arith.constant 0 : i32
    %c0_i32_0 = arith.constant 0 : i32
    return %arg0, %c0_i32 : i32, i32
  }
  func.func @transform_1(%arg0: i32) -> (i32, i32) {
    %c0_i32 = arith.constant 0 : i32
    %c0_i32_0 = arith.constant 0 : i32
    %c0_i32_1 = arith.constant 0 : i32
    return %c0_i32, %c0_i32_0 : i32, i32
  }
  func.func @transform_2(%arg0: i32) -> (i32, i32) {
    %c0_i32 = arith.constant 0 : i32
    %c0_i32_0 = arith.constant 0 : i32
    %c0_i32_1 = arith.constant 0 : i32
    return %c0_i32, %c0_i32_0 : i32, i32
  }
  func.func @transform_3(%arg0: i32) -> (i32, i32) {
    %c0_i32 = arith.constant 0 : i32
    %c0_i32_0 = arith.constant 0 : i32
    %c0_i32_1 = arith.constant 0 : i32
    return %c0_i32, %c0_i32_0 : i32, i32
  }
  func.func @transform_4(%arg0: i32) -> (i32, i32) {
    %c0_i32 = arith.constant 0 : i32
    %c0_i32_0 = arith.constant 0 : i32
    %c0_i32_1 = arith.constant 0 : i32
    return %c0_i32, %c0_i32_0 : i32, i32
  }
  func.func @transform_5(%arg0: i32) -> (i32, i32) {
    %c0_i32 = arith.constant 0 : i32
    %c0_i32_0 = arith.constant 0 : i32
    return %arg0, %c0_i32 : i32, i32
  }
  func.func @transform_6(%arg0: i32) -> (i32, i32) {
    %c0_i32 = arith.constant 0 : i32
    %c0_i32_0 = arith.constant 0 : i32
    return %arg0, %c0_i32 : i32, i32
  }
}

</mosaic_0001>

<llo_original>
// kernel: tpu_custom_call.1
$region0: #{tpu_custom_call.1}
  #allocation0 [shape = 'u32[]', space=smem, size = 0x4, offset = 0x4, fixed_abs, tag = 'smem constant byte address 0x4 - core index']
  #allocation1 [shape = 'u32[144,128]{1,0:T(1,128)}', space=vmem, size = 0x12000, scoped, tag = 'internal scratch']
  %s0 = inlined_call_operand.vmem [shape: f32[8,16], index: 0, kind: input, shape index: {}]
  %s1 = inlined_call_operand.vmem [shape: f32[16,20], index: 1, kind: input, shape index: {}]
  %s2 = inlined_call_operand.vmem [shape: f32[1,20], index: 2, kind: input, shape index: {}]
  %s3 = inlined_call_operand.vmem [shape: f32[20,5], index: 3, kind: input, shape index: {}]
  %s4 = inlined_call_operand.vmem [shape: f32[1,5], index: 4, kind: input, shape index: {}]
  %s5 = inlined_call_operand.hbm [shape: f32[8,5], index: 5, kind: output, shape index: {0}]
  %s6 = inlined_call_operand.hbm [shape: f32[8,5], index: 6, kind: output, shape index: {1}]
  %7 = xla_tuple %s5, %s6
  %s8 = sld [smem:[#allocation0]]
  $region38: #{tpu_custom_call.1} parent=0
    _
  %s10 = ssub.s32 1, %s8
  %s11 = scalar_select 0, %s10, %s8
  $region1: #{tpu_custom_call.1} parent=0
    #allocation2 [shape = 'u8[4096]{0}', space=vmem, size = 0x1000, scoped, tag = 'output window, operand 0, single buffered']
    #allocation3 [shape = 's32[1]{0}', space=sflag, size = 0x4, scoped, tag = 'scoped memory for tpu_custom_call.1']
    #allocation4 [shape = 'u8[4096]{0}', space=vmem, size = 0x1000, scoped, tag = 'output window, operand 1, single buffered']
    #allocation5 [shape = 's32[1]{0}', space=sflag, size = 0x4, scoped, tag = 'scoped memory for tpu_custom_call.1']
    %12 = vsyncpa [#allocation3], 0
    %13 = vsyncpa [#allocation5], 0
    // Predicated region
    $region2: #{tpu_custom_call.1} parent=1 // pred_check
      _
    $region3: #{tpu_custom_call.1} parent=1 // pred_check_branch
      %15 = sbr.rel (0) target = $region5
    $region4: #{tpu_custom_call.1} parent=1 // pred_region
      _
    $region5: #{tpu_custom_call.1} parent=1 // pred_fallthru
      _
    // Predicated region
    $region6: #{tpu_custom_call.1} parent=1 // pred_check
      _
    $region7: #{tpu_custom_call.1} parent=1 // pred_check_branch
      %17 = sbr.rel (0) target = $region9
    $region8: #{tpu_custom_call.1} parent=1 // pred_region
      _
    $region9: #{tpu_custom_call.1} parent=1 // pred_fallthru
      _
    // Predicated region
    $region10: #{tpu_custom_call.1} parent=1 // pred_check
      _
    $region11: #{tpu_custom_call.1} parent=1 // pred_check_branch
      %19 = sbr.rel (0) target = $region13
    $region12: #{tpu_custom_call.1} parent=1 // pred_region
      _
    $region13: #{tpu_custom_call.1} parent=1 // pred_fallthru
      _
    // Predicated region
    $region14: #{tpu_custom_call.1} parent=1 // pred_check
      _
    $region15: #{tpu_custom_call.1} parent=1 // pred_check_branch
      %21 = sbr.rel (0) target = $region17
    $region16: #{tpu_custom_call.1} parent=1 // pred_region
      _
    $region17: #{tpu_custom_call.1} parent=1 // pred_fallthru
      _
    // Predicated region
    $region18: #{tpu_custom_call.1} parent=1 // pred_check
      _
    $region19: #{tpu_custom_call.1} parent=1 // pred_check_branch
      %23 = sbr.rel (0) target = $region21
    $region20: #{tpu_custom_call.1} parent=1 // pred_region
      _
    $region21: #{tpu_custom_call.1} parent=1 // pred_fallthru
      _
    %v24 = vld [vmem:[%s0] sm:$0xff]
    %v25 = vld [vmem:[%s1] sm:$0xff]
    %v26 = vld [vmem:[%s1 + $0x8] sm:$0xff]
    %v27 = vld [vmem:[%s2] sm:$0x1]
    %v29 = vlaneseq
    %v30 = vshrl.u32 %v29, 7
    %v31 = vsub.s32 0, %v30
    %v32 = vrot.slane %v27, %v31
    %vm34 = vcmask 130048
    %v36 = vsel %vm34, %v24, 0
    %38 = vmatprep.subr.mxu0 0.0
    %39 = vmatpush1.msra.mxu0 0.0
    %40 = vmatprep.subr.mxu0 0.0
    %41 = vmatpush1.msra.mxu0 0.0
    %42 = vmatprep.subr.mxu0 0.0
    %43 = vmatpush1.msra.mxu0 0.0
    %44 = vmatprep.subr.mxu0 0.0
    %45 = vmatpush1.msra.mxu0 0.0
    %46 = vmatprep.subr.mxu0 0.0
    %47 = vmatpush1.msra.mxu0 0.0
    %48 = vmatprep.subr.mxu0 0.0
    %49 = vmatpush1.msra.mxu0 0.0
    %50 = vmatprep.subr.mxu0 0.0
    %51 = vmatpush1.msra.mxu0 0.0
    %52 = vmatprep.subr.mxu0 0.0
    %53 = vmatpush1.msra.mxu0 0.0
    %54 = vmatprep.subr.mxu0 0.0
    %55 = vmatpush1.msra.mxu0 0.0
    %56 = vmatprep.subr.mxu0 0.0
    %57 = vmatpush1.msra.mxu0 0.0
    %58 = vmatprep.subr.mxu0 0.0
    %59 = vmatpush1.msra.mxu0 0.0
    %60 = vmatprep.subr.mxu0 0.0
    %61 = vmatpush1.msra.mxu0 0.0
    %62 = vmatprep.subr.mxu0 0.0
    %63 = vmatpush1.msra.mxu0 0.0
    %64 = vmatprep.subr.mxu0 0.0
    %65 = vmatpush1.msra.mxu0 0.0
    %66 = vmatprep.subr.mxu0 0.0
    %67 = vmatpush1.msra.mxu0 %v26
    %68 = vmatprep.subr.mxu0 0.0
    %69 = vmatpush1.msra.mxu0 %v25
    %70 = vmatprep.subr.mxu0 0.0
    %71 = vmatpush2.msra.mxu0 0.0
    %72 = vmatprep.subr.mxu0 0.0
    %73 = vmatpush2.msra.mxu0 0.0
    %74 = vmatprep.subr.mxu0 0.0
    %75 = vmatpush2.msra.mxu0 0.0
    %76 = vmatprep.subr.mxu0 0.0
    %77 = vmatpush2.msra.mxu0 0.0
    %78 = vmatprep.subr.mxu0 0.0
    %79 = vmatpush2.msra.mxu0 0.0
    %80 = vmatprep.subr.mxu0 0.0
    %81 = vmatpush2.msra.mxu0 0.0
    %82 = vmatprep.subr.mxu0 0.0
    %83 = vmatpush2.msra.mxu0 0.0
    %84 = vmatprep.subr.mxu0 0.0
    %85 = vmatpush2.msra.mxu0 0.0
    %86 = vmatprep.subr.mxu0 0.0
    %87 = vmatpush2.msra.mxu0 0.0
    %88 = vmatprep.subr.mxu0 0.0
    %89 = vmatpush2.msra.mxu0 0.0
    %90 = vmatprep.subr.mxu0 0.0
    %91 = vmatpush2.msra.mxu0 0.0
    %92 = vmatprep.subr.mxu0 0.0
    %93 = vmatpush2.msra.mxu0 0.0
    %94 = vmatprep.subr.mxu0 0.0
    %95 = vmatpush2.msra.mxu0 0.0
    %96 = vmatprep.subr.mxu0 0.0
    %97 = vmatpush2.msra.mxu0 0.0
    %98 = vmatprep.subr.mxu0 0.0
    %99 = vmatpush2.msra.mxu0 0.0
    %100 = vmatprep.subr.mxu0 0.0
    %101 = vmatpush2.msra.mxu0 0.0
    %102 = vmatprep.mubr.f32.mxu0 0.0
    %103 = vmatmul.mubr.f32.gmra.mxu0 %v36
    %v104 = vpop.f32.mrf.mxu0
    %v105 = vadd.f32 %v32, %v104
    %v106 = vpop.f32.mrf.mxu0
    %107 = vdwg.mxu0
    %vm108 = vcmp.gt.f32.partialorder %v105, 0.0
    %v109 = vmul.f32 %v105, 0.01
    %v110 = vsel %vm108, %v105, %v109
    %v111 = vld [vmem:[%s3] sm:$0xff]
    %v112 = vld [vmem:[%s3 + $0x8] sm:$0xff]
    %v113 = vld [vmem:[%s3 + $0x10] sm:$0xf]
    %v114 = vld [vmem:[%s4] sm:$0x1]
    %v116 = vlaneseq
    %v117 = vshrl.u32 %v116, 7
    %v118 = vsub.s32 0, %v117
    %v119 = vrot.slane %v114, %v118
    %vm121 = vcmask 162816
    %v123 = vsel %vm121, %v110, 0
    %vm125 = vcmask 1043456
    %v127 = vsel %vm125, %v113, 0
    %129 = vmatprep.subr.mxu0 0.0
    %130 = vmatpush1.msra.mxu0 0.0
    %131 = vmatprep.subr.mxu0 0.0
    %132 = vmatpush1.msra.mxu0 0.0
    %133 = vmatprep.subr.mxu0 0.0
    %134 = vmatpush1.msra.mxu0 0.0
    %135 = vmatprep.subr.mxu0 0.0
    %136 = vmatpush1.msra.mxu0 0.0
    %137 = vmatprep.subr.mxu0 0.0
    %138 = vmatpush1.msra.mxu0 0.0
    %139 = vmatprep.subr.mxu0 0.0
    %140 = vmatpush1.msra.mxu0 0.0
    %141 = vmatprep.subr.mxu0 0.0
    %142 = vmatpush1.msra.mxu0 0.0
    %143 = vmatprep.subr.mxu0 0.0
    %144 = vmatpush1.msra.mxu0 0.0
    %145 = vmatprep.subr.mxu0 0.0
    %146 = vmatpush1.msra.mxu0 0.0
    %147 = vmatprep.subr.mxu0 0.0
    %148 = vmatpush1.msra.mxu0 0.0
    %149 = vmatprep.subr.mxu0 0.0
    %150 = vmatpush1.msra.mxu0 0.0
    %151 = vmatprep.subr.mxu0 0.0
    %152 = vmatpush1.msra.mxu0 0.0
    %153 = vmatprep.subr.mxu0 0.0
    %154 = vmatpush1.msra.mxu0 0.0
    %155 = vmatprep.subr.mxu0 0.0
    %156 = vmatpush1.msra.mxu0 %v127
    %157 = vmatprep.subr.mxu0 0.0
    %158 = vmatpush1.msra.mxu0 %v112
    %159 = vmatprep.subr.mxu0 0.0
    %160 = vmatpush1.msra.mxu0 %v111
    %161 = vmatprep.subr.mxu0 0.0
    %162 = vmatpush2.msra.mxu0 0.0
    %163 = vmatprep.subr.mxu0 0.0
    %164 = vmatpush2.msra.mxu0 0.0
    %165 = vmatprep.subr.mxu0 0.0
    %166 = vmatpush2.msra.mxu0 0.0
    %167 = vmatprep.subr.mxu0 0.0
    %168 = vmatpush2.msra.mxu0 0.0
    %169 = vmatprep.subr.mxu0 0.0
    %170 = vmatpush2.msra.mxu0 0.0
    %171 = vmatprep.subr.mxu0 0.0
    %172 = vmatpush2.msra.mxu0 0.0
    %173 = vmatprep.subr.mxu0 0.0
    %174 = vmatpush2.msra.mxu0 0.0
    %175 = vmatprep.subr.mxu0 0.0
    %176 = vmatpush2.msra.mxu0 0.0
    %177 = vmatprep.subr.mxu0 0.0
    %178 = vmatpush2.msra.mxu0 0.0
    %179 = vmatprep.subr.mxu0 0.0
    %180 = vmatpush2.msra.mxu0 0.0
    %181 = vmatprep.subr.mxu0 0.0
    %182 = vmatpush2.msra.mxu0 0.0
    %183 = vmatprep.subr.mxu0 0.0
    %184 = vmatpush2.msra.mxu0 0.0
    %185 = vmatprep.subr.mxu0 0.0
    %186 = vmatpush2.msra.mxu0 0.0
    %187 = vmatprep.subr.mxu0 0.0
    %188 = vmatpush2.msra.mxu0 0.0
    %189 = vmatprep.subr.mxu0 0.0
    %190 = vmatpush2.msra.mxu0 0.0
    %191 = vmatprep.subr.mxu0 0.0
    %192 = vmatpush2.msra.mxu0 0.0
    %193 = vmatprep.mubr.f32.mxu0 0.0
    %194 = vmatmul.mubr.f32.gmra.mxu0 %v123
    %v195 = vpop.f32.mrf.mxu0
    %v196 = vadd.f32 %v119, %v195
    %v197 = vpop.f32.mrf.mxu0
    %198 = vdwg.mxu0
    %vm199 = vcmask 39936
    %v200 = vsel %vm199, %v196, -inf
    %201 = vmax.xlane.f32.xlu0 %v200
    %v202 = vpop.xlane.xlu0 %201
    %v203 = vsub.f32 %v196, %v202
    %v204 = vmul.f32 %v203, 1.442695
    %v205 = vpow.pop %v204
    %v206 = vsel %vm199, %v205, 0.0
    %207 = vadd.xlane.f32.xlu0 %v206
    %v208 = vpop.xlane.xlu0 %207
    %v209 = vrcp.pop %v208
    %v210 = vmul.f32 %v205, %v209
    %211 = vst.msk [vmem:[#allocation2] sm:$0xff] %vm199, %v210
    %v212 = vlog2.pop %v208
    %v213 = vmul.f32 %v212, 0.6931472
    %v214 = vsub.f32 %v203, %v213
    %215 = vst.msk [vmem:[#allocation4] sm:$0xff] %vm199, %v214
    // Predicated region
    $region22: #{tpu_custom_call.1} parent=1 // pred_check
      _
    $region23: #{tpu_custom_call.1} parent=1 // pred_check_branch
      %217 = sbr.rel (0) target = $region25
    $region24: #{tpu_custom_call.1} parent=1 // pred_region
      %s219 = ssub.s32 128, 128
      %220 = vsyncadd [#allocation3], %s219
      %s222 = sshll.u32 [#allocation2], 4
      %s223 = int_to_ptr.vmem [resolvable:$true] %s222
      %225 = dma.vmem_to_hbm [thread:$0]  %s223, 128, %s5, [#allocation3]
    $region25: #{tpu_custom_call.1} parent=1 // pred_fallthru
      _
    // Predicated region
    $region26: #{tpu_custom_call.1} parent=1 // pred_check
      _
    $region27: #{tpu_custom_call.1} parent=1 // pred_check_branch
      %227 = sbr.rel (0) target = $region29
    $region28: #{tpu_custom_call.1} parent=1 // pred_region
      %s229 = ssub.s32 128, 128
      %230 = vsyncadd [#allocation5], %s229
      %s232 = sshll.u32 [#allocation4], 4
      %s233 = int_to_ptr.vmem [resolvable:$true] %s232
      %235 = dma.vmem_to_hbm [thread:$0]  %s233, 128, %s6, [#allocation5]
    $region29: #{tpu_custom_call.1} parent=1 // pred_fallthru
      _
    // Predicated region
    $region30: #{tpu_custom_call.1} parent=1 // pred_check
      _
    $region31: #{tpu_custom_call.1} parent=1 // pred_check_branch
      %237 = sbr.rel (0) target = $region33
    $region32: #{tpu_custom_call.1} parent=1 // pred_region
      %238 = dma.done [#allocation3], 128
    $region33: #{tpu_custom_call.1} parent=1 // pred_fallthru
      _
    // Predicated region
    $region34: #{tpu_custom_call.1} parent=1 // pred_check
      _
    $region35: #{tpu_custom_call.1} parent=1 // pred_check_branch
      %240 = sbr.rel (0) target = $region37
    $region36: #{tpu_custom_call.1} parent=1 // pred_region
      %241 = dma.done [#allocation5], 128
    $region37: #{tpu_custom_call.1} parent=1 // pred_fallthru
      _
    %242 = vsyncpa [#allocation3], 1
    %243 = vsyncpa [#allocation5], 1

</llo_original>
